<compile_context>
chip_gen: v7x
topology: tpu7x:2x2x1
jax: 0.10.0
libtpu: 0.0.40
codegen_flags: <defaults>
</compile_context>

<pallas_src>
import jax
import jax.numpy as jnp
from jax.experimental import pallas as pl
from jax.experimental.pallas import tpu as pltpu

# consts.* are not shipped with the module -- standard CAAE values.
NUM_Z_CHANNELS = 50
NUM_ENCODER_CHANNELS = 64
BN_EPS = 1e-5

ZDIM = NUM_Z_CHANNELS              # 50
D1 = NUM_ENCODER_CHANNELS          # 64
D2 = NUM_ENCODER_CHANNELS // 2     # 32
D3 = NUM_ENCODER_CHANNELS // 4     # 16

# ---- Packed parameter layouts -------------------------------------------------
# Weight slab (bf16): each hidden-layer weight starts at a row offset that is a
# multiple of 16 (bf16 packed sublane tile).
_ROUND = 16
W1_OFF = 0
W2_OFF = W1_OFF + ((ZDIM + _ROUND - 1) // _ROUND) * _ROUND     # 64
W3_OFF = W2_OFF + D1                                           # 128
W_ROWS = W3_OFF + D2                                           # 160
W_COLS = D1                                                    # 64

# BN/affine slab (fp32), shape (8, 64):
#   row 0: gamma1   row 1: beta1
#   row 2: gamma2   row 3: beta2
#   row 4: gamma3   row 5: beta3
#   row 6: W4^T (16 values)   row 7: b4 (1 value)
BN_ROWS = 8


def _linear_bn_relu(x, w_bf16, gamma, beta):
    """y = x @ W (bf16 MXU, fp32 acc) -> train-mode BatchNorm1d -> ReLU.

    The PyTorch Linear bias is intentionally omitted: a bias immediately
    followed by BatchNorm shifts the batch mean and cancels exactly, so the
    forward output is identical.  BN uses biased (1/N) batch variance in fp32.
    """
    y = jnp.dot(x.astype(jnp.bfloat16), w_bf16,
                preferred_element_type=jnp.float32)            # (B, C) fp32
    m = jnp.mean(y, axis=0, keepdims=True)                     # (1, C)
    var = jnp.mean(jnp.square(y - m), axis=0, keepdims=True)   # centered, 2-pass
    scale = gamma * jax.lax.rsqrt(var + BN_EPS)                # (1, C)
    shift = beta - m * scale
    return jnp.maximum(y * scale + shift, 0.0)                 # ReLU


def discriminator_z_kernel(z_ref, w_ref, bn_ref, out_ref):
    x = z_ref[...]                                             # (B, 50) fp32

    # Static slices into the two packed parameter buffers.
    w1 = w_ref[W1_OFF:W1_OFF + ZDIM, 0:D1]                     # (50, 64) bf16
    w2 = w_ref[W2_OFF:W2_OFF + D1, 0:D2]                       # (64, 32) bf16
    w3 = w_ref[W3_OFF:W3_OFF + D2, 0:D3]                       # (32, 16) bf16

    g1, be1 = bn_ref[0:1, 0:D1], bn_ref[1:2, 0:D1]
    g2, be2 = bn_ref[2:3, 0:D2], bn_ref[3:4, 0:D2]
    g3, be3 = bn_ref[4:5, 0:D3], bn_ref[5:6, 0:D3]
    w4_row = bn_ref[6:7, 0:D3]                                 # (1, 16) fp32 (= W4^T)
    b4 = bn_ref[7:8, 0:1]                                      # (1, 1)  fp32

    h = _linear_bn_relu(x, w1, g1, be1)
    h = _linear_bn_relu(h, w2, g2, be2)
    h = _linear_bn_relu(h, w3, g3, be3)

    # Final 16->1 Linear on the VPU + XLU row-reduce (an N=1, K=16 MXU matmul
    # wastes the systolic array and adds weight-load/drain latency).
    out_ref[...] = jnp.sum(h * w4_row, axis=-1, keepdims=True) + b4


def _discriminator_z_call(z_stack, w_packed, bn_packed):
    """z_stack: (G, B, ZDIM).  One launch; grid=(G,) over independent groups."""
    G, B, _ = z_stack.shape
    grid_spec = pltpu.PrefetchScalarGridSpec(
        num_scalar_prefetch=0,
        grid=(G,),
        in_specs=[
            pl.BlockSpec((None, B, ZDIM), lambda g: (g, 0, 0)),
            # Same block for every group -> weights stay VMEM-resident.
            pl.BlockSpec((W_ROWS, W_COLS), lambda g: (0, 0)),
            pl.BlockSpec((BN_ROWS, W_COLS), lambda g: (0, 0)),
        ],
        out_specs=pl.BlockSpec((None, B, 1), lambda g: (g, 0, 0)),
    )
    return pl.pallas_call(
        discriminator_z_kernel,
        out_shape=jax.ShapeDtypeStruct((G, B, 1), jnp.float32),
        grid_spec=grid_spec,
        compiler_params=pltpu.CompilerParams(
            dimension_semantics=("parallel",)),
    )(z_stack, w_packed, bn_packed)


def discriminator_z_forward(params, z):
    """DiscriminatorZ.forward for one batch: z (B, 50) -> logits (B, 1)."""
    out = _discriminator_z_call(z[None], params["w_packed"], params["bn_packed"])
    return out[0]


def discriminator_z_forward_pair(params, z_a, z_b):
    """The two discriminator-z evaluations of a CAAE training step (prior
    sample and encoder output) fused into a single launch with grid=(2,)."""
    out = _discriminator_z_call(jnp.stack([z_a, z_b], axis=0),
                                params["w_packed"], params["bn_packed"])
    return out[0], out[1]


# ---- Parameter packing (done ONCE at init; keep optimizer state packed) -------
def pack_params(ws, gammas, betas, w4, b4):
    """ws: [(50,64),(64,32),(32,16)] fp32; gammas/betas per layer; w4 (16,1); b4 (1,).

    The Linear biases of layers 1-3 are not taken: they are mathematical no-ops
    in front of train-mode BatchNorm (they shift the batch mean and cancel).
    """
    w_packed = jnp.zeros((W_ROWS, W_COLS), jnp.float32)
    for off, w in zip((W1_OFF, W2_OFF, W3_OFF), ws):
        din, dout = w.shape
        w_packed = w_packed.at[off:off + din, :dout].set(w)

    bn_packed = jnp.zeros((BN_ROWS, W_COLS), jnp.float32)
    for i, (g, b) in enumerate(zip(gammas, betas)):
        d = g.shape[0]
        bn_packed = bn_packed.at[2 * i, :d].set(g)
        bn_packed = bn_packed.at[2 * i + 1, :d].set(b)
    bn_packed = bn_packed.at[6, :w4.shape[0]].set(w4[:, 0])
    bn_packed = bn_packed.at[7, :1].set(jnp.reshape(b4, (1,)))

    return {"w_packed": w_packed.astype(jnp.bfloat16),   # one bf16 DMA
            "bn_packed": bn_packed}                       # one fp32 DMA


def init_params(key):
    dims = (ZDIM, D1, D2, D3)                       # (50, 64, 32, 16)
    keys = jax.random.split(key, 8)
    ws, gammas, betas = [], [], []
    for i, (din, dout) in enumerate(zip(dims[:-1], dims[1:])):
        ws.append(0.05 * jax.random.normal(keys[i], (din, dout), jnp.float32))
        # Non-default BN affine values so the scale/shift path is exercised.
        gammas.append(1.0 + 0.1 * jax.random.normal(keys[3 + i], (dout,), jnp.float32))
        betas.append(0.1 * jax.random.normal(keys[6], (dout,), jnp.float32))
    w4 = 0.05 * jax.random.normal(keys[7], (dims[-1], 1), jnp.float32)
    b4 = jnp.array([0.02], jnp.float32)
    return pack_params(ws, gammas, betas, w4, b4)


# ---- Pure-JAX reference (same math, for correctness check) --------------------
def _reference_forward(params, z):
    wp = params["w_packed"]
    bn = params["bn_packed"]
    w1 = wp[W1_OFF:W1_OFF + ZDIM, 0:D1]
    w2 = wp[W2_OFF:W2_OFF + D1, 0:D2]
    w3 = wp[W3_OFF:W3_OFF + D2, 0:D3]

    def lbr(x, w, g, b):
        y = jnp.dot(x.astype(jnp.bfloat16), w, preferred_element_type=jnp.float32)
        m = jnp.mean(y, axis=0, keepdims=True)
        v = jnp.mean(jnp.square(y - m), axis=0, keepdims=True)
        return jnp.maximum((y - m) * (g * jax.lax.rsqrt(v + BN_EPS)) + b, 0.0)

    h = lbr(z, w1, bn[0:1, 0:D1], bn[1:2, 0:D1])
    h = lbr(h, w2, bn[2:3, 0:D2], bn[3:4, 0:D2])
    h = lbr(h, w3, bn[4:5, 0:D3], bn[5:6, 0:D3])
    return jnp.sum(h * bn[6:7, 0:D3], axis=-1, keepdims=True) + bn[7:8, 0:1]


if __name__ == "__main__":
    key = jax.random.PRNGKey(0)
    k_z1, k_z2, k_par = jax.random.split(key, 3)

    B = 16  # multiple of 16 so bf16/fp32 sublane groups are fully packed
    z_prior = jax.random.normal(k_z1, (B, ZDIM), jnp.float32)
    z_enc = jax.random.normal(k_z2, (B, ZDIM), jnp.float32)
    params = init_params(k_par)

    # Single-batch forward (matches DiscriminatorZ.forward).
    fwd = jax.jit(discriminator_z_forward)
    logits = fwd(params, z_prior)
    jax.block_until_ready(logits)
    assert logits.shape == (B, 1)

    # Fused pair forward: both discriminator-z calls of a CAAE step, one launch.
    fwd_pair = jax.jit(discriminator_z_forward_pair)
    logits_prior, logits_enc = fwd_pair(params, z_prior, z_enc)
    jax.block_until_ready((logits_prior, logits_enc))

    # Correctness vs. pure-JAX reference.
    ref_prior = _reference_forward(params, z_prior)
    ref_enc = _reference_forward(params, z_enc)
    assert bool(jnp.all(jnp.isfinite(logits)))
    assert bool(jnp.allclose(logits, ref_prior, atol=5e-2, rtol=5e-2))
    assert bool(jnp.allclose(logits_prior, ref_prior, atol=5e-2, rtol=5e-2))
    assert bool(jnp.allclose(logits_enc, ref_enc, atol=5e-2, rtol=5e-2))

    print("KERNEL_OK")
</pallas_src>

<mosaic_0001>
module attributes {stable_mosaic.version = 11 : i64} {
  func.func @discriminator_z_kernel(%arg0: i32, %arg1: memref<1x16x50xf32, #tpu.memory_space<vmem>>, %arg2: memref<160x64xbf16, #tpu.memory_space<vmem>>, %arg3: memref<8x64xf32, #tpu.memory_space<vmem>>, %arg4: memref<1x16x1xf32, #tpu.memory_space<vmem>>) attributes {dimension_semantics = [#tpu.dimension_semantics<parallel>], iteration_bounds = array<i64: 1>, scalar_prefetch = 0 : i64, scratch_operands = 0 : i64, tpu.core_type = #tpu.core_type<tc>, window_params = [{transform_indices = @transform_0, window_bounds = array<i64: 1, 16, 50>}, {pipeline_mode = #tpu.pipeline_mode<synchronous>, transform_indices = @transform_1, window_bounds = array<i64: 160, 64>}, {pipeline_mode = #tpu.pipeline_mode<synchronous>, transform_indices = @transform_2, window_bounds = array<i64: 8, 64>}, {transform_indices = @transform_3, window_bounds = array<i64: 1, 16, 1>}]} {
    %c0 = arith.constant 0 : index
    %c0_0 = arith.constant 0 : index
    %c0_1 = arith.constant 0 : index
    %0 = vector.load %arg1[%c0, %c0_0, %c0_1] : memref<1x16x50xf32, #tpu.memory_space<vmem>>, vector<1x16x50xf32>
    %1 = vector.shape_cast %0 : vector<1x16x50xf32> to vector<16x50xf32>
    %c0_2 = arith.constant 0 : index
    %c0_3 = arith.constant 0 : index
    %2 = vector.load %arg2[%c0_2, %c0_3] : memref<160x64xbf16, #tpu.memory_space<vmem>>, vector<50x64xbf16>
    %c64 = arith.constant 64 : index
    %c0_4 = arith.constant 0 : index
    %3 = vector.load %arg2[%c64, %c0_4] : memref<160x64xbf16, #tpu.memory_space<vmem>>, vector<64x32xbf16>
    %c128 = arith.constant 128 : index
    %c0_5 = arith.constant 0 : index
    %4 = vector.load %arg2[%c128, %c0_5] : memref<160x64xbf16, #tpu.memory_space<vmem>>, vector<32x16xbf16>
    %c0_6 = arith.constant 0 : index
    %c0_7 = arith.constant 0 : index
    %5 = vector.load %arg3[%c0_6, %c0_7] : memref<8x64xf32, #tpu.memory_space<vmem>>, vector<1x64xf32>
    %c1 = arith.constant 1 : index
    %c0_8 = arith.constant 0 : index
    %6 = vector.load %arg3[%c1, %c0_8] : memref<8x64xf32, #tpu.memory_space<vmem>>, vector<1x64xf32>
    %c2 = arith.constant 2 : index
    %c0_9 = arith.constant 0 : index
    %7 = vector.load %arg3[%c2, %c0_9] : memref<8x64xf32, #tpu.memory_space<vmem>>, vector<1x32xf32>
    %c3 = arith.constant 3 : index
    %c0_10 = arith.constant 0 : index
    %8 = vector.load %arg3[%c3, %c0_10] : memref<8x64xf32, #tpu.memory_space<vmem>>, vector<1x32xf32>
    %c4 = arith.constant 4 : index
    %c0_11 = arith.constant 0 : index
    %9 = vector.load %arg3[%c4, %c0_11] : memref<8x64xf32, #tpu.memory_space<vmem>>, vector<1x16xf32>
    %c5 = arith.constant 5 : index
    %c0_12 = arith.constant 0 : index
    %10 = vector.load %arg3[%c5, %c0_12] : memref<8x64xf32, #tpu.memory_space<vmem>>, vector<1x16xf32>
    %c6 = arith.constant 6 : index
    %c0_13 = arith.constant 0 : index
    %11 = vector.load %arg3[%c6, %c0_13] : memref<8x64xf32, #tpu.memory_space<vmem>>, vector<1x16xf32>
    %c7 = arith.constant 7 : index
    %c0_14 = arith.constant 0 : index
    %12 = vector.load %arg3[%c7, %c0_14] : memref<8x64xf32, #tpu.memory_space<vmem>>, vector<1x1xf32>
    %13 = arith.truncf %1 : vector<16x50xf32> to vector<16x50xbf16>
    %cst = arith.constant dense<0.000000e+00> : vector<16x64xf32>
    %14 = tpu.matmul %13, %2, %cst {dimension_numbers = #tpu.dot_dimension_numbers<[1], [0], [0], [1], [0, 0, 1, 1], [], []>} : vector<16x50xbf16>, vector<50x64xbf16>, vector<16x64xf32> -> vector<16x64xf32>
    %cst_15 = arith.constant dense<0.000000e+00> : vector<64xf32>
    %15 = vector.multi_reduction <add>, %14, %cst_15 [0] : vector<16x64xf32> to vector<64xf32>
    %16 = vector.shape_cast %15 : vector<64xf32> to vector<1x64xf32>
    %cst_16 = arith.constant 1.600000e+01 : f32
    %17 = vector.broadcast %cst_16 : f32 to vector<1x64xf32>
    %18 = arith.divf %16, %17 : vector<1x64xf32>
    %19 = vector.broadcast %18 : vector<1x64xf32> to vector<16x64xf32>
    %20 = arith.subf %14, %19 : vector<16x64xf32>
    %21 = arith.mulf %20, %20 : vector<16x64xf32>
    %cst_17 = arith.constant dense<0.000000e+00> : vector<64xf32>
    %22 = vector.multi_reduction <add>, %21, %cst_17 [0] : vector<16x64xf32> to vector<64xf32>
    %23 = vector.shape_cast %22 : vector<64xf32> to vector<1x64xf32>
    %cst_18 = arith.constant 1.600000e+01 : f32
    %24 = vector.broadcast %cst_18 : f32 to vector<1x64xf32>
    %25 = arith.divf %23, %24 : vector<1x64xf32>
    %cst_19 = arith.constant 9.99999974E-6 : f32
    %26 = vector.broadcast %cst_19 : f32 to vector<1x64xf32>
    %27 = arith.addf %25, %26 : vector<1x64xf32>
    %28 = math.rsqrt %27 : vector<1x64xf32>
    %29 = arith.mulf %5, %28 : vector<1x64xf32>
    %30 = arith.mulf %18, %29 : vector<1x64xf32>
    %31 = arith.subf %6, %30 : vector<1x64xf32>
    %32 = vector.broadcast %29 : vector<1x64xf32> to vector<16x64xf32>
    %33 = arith.mulf %14, %32 : vector<16x64xf32>
    %34 = vector.broadcast %31 : vector<1x64xf32> to vector<16x64xf32>
    %35 = arith.addf %33, %34 : vector<16x64xf32>
    %cst_20 = arith.constant 0.000000e+00 : f32
    %36 = vector.broadcast %cst_20 : f32 to vector<16x64xf32>
    %37 = arith.maximumf %35, %36 : vector<16x64xf32>
    %38 = arith.truncf %37 : vector<16x64xf32> to vector<16x64xbf16>
    %cst_21 = arith.constant dense<0.000000e+00> : vector<16x32xf32>
    %39 = tpu.matmul %38, %3, %cst_21 {dimension_numbers = #tpu.dot_dimension_numbers<[1], [0], [0], [1], [0, 0, 1, 1], [], []>} : vector<16x64xbf16>, vector<64x32xbf16>, vector<16x32xf32> -> vector<16x32xf32>
    %cst_22 = arith.constant dense<0.000000e+00> : vector<32xf32>
    %40 = vector.multi_reduction <add>, %39, %cst_22 [0] : vector<16x32xf32> to vector<32xf32>
    %41 = vector.shape_cast %40 : vector<32xf32> to vector<1x32xf32>
    %cst_23 = arith.constant 1.600000e+01 : f32
    %42 = vector.broadcast %cst_23 : f32 to vector<1x32xf32>
    %43 = arith.divf %41, %42 : vector<1x32xf32>
    %44 = vector.broadcast %43 : vector<1x32xf32> to vector<16x32xf32>
    %45 = arith.subf %39, %44 : vector<16x32xf32>
    %46 = arith.mulf %45, %45 : vector<16x32xf32>
    %cst_24 = arith.constant dense<0.000000e+00> : vector<32xf32>
    %47 = vector.multi_reduction <add>, %46, %cst_24 [0] : vector<16x32xf32> to vector<32xf32>
    %48 = vector.shape_cast %47 : vector<32xf32> to vector<1x32xf32>
    %cst_25 = arith.constant 1.600000e+01 : f32
    %49 = vector.broadcast %cst_25 : f32 to vector<1x32xf32>
    %50 = arith.divf %48, %49 : vector<1x32xf32>
    %cst_26 = arith.constant 9.99999974E-6 : f32
    %51 = vector.broadcast %cst_26 : f32 to vector<1x32xf32>
    %52 = arith.addf %50, %51 : vector<1x32xf32>
    %53 = math.rsqrt %52 : vector<1x32xf32>
    %54 = arith.mulf %7, %53 : vector<1x32xf32>
    %55 = arith.mulf %43, %54 : vector<1x32xf32>
    %56 = arith.subf %8, %55 : vector<1x32xf32>
    %57 = vector.broadcast %54 : vector<1x32xf32> to vector<16x32xf32>
    %58 = arith.mulf %39, %57 : vector<16x32xf32>
    %59 = vector.broadcast %56 : vector<1x32xf32> to vector<16x32xf32>
    %60 = arith.addf %58, %59 : vector<16x32xf32>
    %cst_27 = arith.constant 0.000000e+00 : f32
    %61 = vector.broadcast %cst_27 : f32 to vector<16x32xf32>
    %62 = arith.maximumf %60, %61 : vector<16x32xf32>
    %63 = arith.truncf %62 : vector<16x32xf32> to vector<16x32xbf16>
    %cst_28 = arith.constant dense<0.000000e+00> : vector<16x16xf32>
    %64 = tpu.matmul %63, %4, %cst_28 {dimension_numbers = #tpu.dot_dimension_numbers<[1], [0], [0], [1], [0, 0, 1, 1], [], []>} : vector<16x32xbf16>, vector<32x16xbf16>, vector<16x16xf32> -> vector<16x16xf32>
    %cst_29 = arith.constant dense<0.000000e+00> : vector<16xf32>
    %65 = vector.multi_reduction <add>, %64, %cst_29 [0] : vector<16x16xf32> to vector<16xf32>
    %66 = vector.shape_cast %65 : vector<16xf32> to vector<1x16xf32>
    %cst_30 = arith.constant 1.600000e+01 : f32
    %67 = vector.broadcast %cst_30 : f32 to vector<1x16xf32>
    %68 = arith.divf %66, %67 : vector<1x16xf32>
    %69 = vector.broadcast %68 : vector<1x16xf32> to vector<16x16xf32>
    %70 = arith.subf %64, %69 : vector<16x16xf32>
    %71 = arith.mulf %70, %70 : vector<16x16xf32>
    %cst_31 = arith.constant dense<0.000000e+00> : vector<16xf32>
    %72 = vector.multi_reduction <add>, %71, %cst_31 [0] : vector<16x16xf32> to vector<16xf32>
    %73 = vector.shape_cast %72 : vector<16xf32> to vector<1x16xf32>
    %cst_32 = arith.constant 1.600000e+01 : f32
    %74 = vector.broadcast %cst_32 : f32 to vector<1x16xf32>
    %75 = arith.divf %73, %74 : vector<1x16xf32>
    %cst_33 = arith.constant 9.99999974E-6 : f32
    %76 = vector.broadcast %cst_33 : f32 to vector<1x16xf32>
    %77 = arith.addf %75, %76 : vector<1x16xf32>
    %78 = math.rsqrt %77 : vector<1x16xf32>
    %79 = arith.mulf %9, %78 : vector<1x16xf32>
    %80 = arith.mulf %68, %79 : vector<1x16xf32>
    %81 = arith.subf %10, %80 : vector<1x16xf32>
    %82 = vector.broadcast %79 : vector<1x16xf32> to vector<16x16xf32>
    %83 = arith.mulf %64, %82 : vector<16x16xf32>
    %84 = vector.broadcast %81 : vector<1x16xf32> to vector<16x16xf32>
    %85 = arith.addf %83, %84 : vector<16x16xf32>
    %cst_34 = arith.constant 0.000000e+00 : f32
    %86 = vector.broadcast %cst_34 : f32 to vector<16x16xf32>
    %87 = arith.maximumf %85, %86 : vector<16x16xf32>
    %88 = vector.broadcast %11 : vector<1x16xf32> to vector<16x16xf32>
    %89 = arith.mulf %87, %88 : vector<16x16xf32>
    %cst_35 = arith.constant dense<0.000000e+00> : vector<16xf32>
    %90 = vector.multi_reduction <add>, %89, %cst_35 [1] : vector<16x16xf32> to vector<16xf32>
    %91 = vector.shape_cast %90 : vector<16xf32> to vector<16x1xf32>
    %92 = vector.broadcast %12 : vector<1x1xf32> to vector<16x1xf32>
    %93 = arith.addf %91, %92 : vector<16x1xf32>
    %c0_36 = arith.constant 0 : index
    %c0_37 = arith.constant 0 : index
    %c0_38 = arith.constant 0 : index
    %94 = vector.load %arg4[%c0_36, %c0_37, %c0_38] : memref<1x16x1xf32, #tpu.memory_space<vmem>>, vector<1x16x1xf32>
    %95 = vector.shape_cast %94 : vector<1x16x1xf32> to vector<16x1xf32>
    %96 = vector.shape_cast %93 : vector<16x1xf32> to vector<1x16x1xf32>
    tpu.vector_store %arg4[%c0_36, %c0_37, %c0_38], %96 {strides = array<i32>} : memref<1x16x1xf32, #tpu.memory_space<vmem>>, vector<1x16x1xf32>,
    return
  }
  func.func @transform_0(%arg0: i32) -> (i32, i32, i32) {
    %c0_i32 = arith.constant 0 : i32
    %c0_i32_0 = arith.constant 0 : i32
    %c0_i32_1 = arith.constant 0 : i32
    return %arg0, %c0_i32, %c0_i32_0 : i32, i32, i32
  }
  func.func @transform_1(%arg0: i32) -> (i32, i32) {
    %c0_i32 = arith.constant 0 : i32
    %c0_i32_0 = arith.constant 0 : i32
    %c0_i32_1 = arith.constant 0 : i32
    return %c0_i32, %c0_i32_0 : i32, i32
  }
  func.func @transform_2(%arg0: i32) -> (i32, i32) {
    %c0_i32 = arith.constant 0 : i32
    %c0_i32_0 = arith.constant 0 : i32
    %c0_i32_1 = arith.constant 0 : i32
    return %c0_i32, %c0_i32_0 : i32, i32
  }
  func.func @transform_3(%arg0: i32) -> (i32, i32, i32) {
    %c0_i32 = arith.constant 0 : i32
    %c0_i32_0 = arith.constant 0 : i32
    %c0_i32_1 = arith.constant 0 : i32
    return %arg0, %c0_i32, %c0_i32_0 : i32, i32, i32
  }
}

</mosaic_0001>

<llo_original>
// kernel: discriminator_z_forward.1
$region0: #{discriminator_z_forward.1}
  #allocation0 [shape = 'u32[]', space=smem, size = 0x4, offset = 0x4, fixed_abs, tag = 'smem constant byte address 0x4 - core index']
  #allocation1 [shape = 'u32[144,128]{1,0:T(1,128)}', space=vmem, size = 0x12000, scoped, tag = 'internal scratch']
  %s0 = inlined_call_operand.vmem [shape: f32[1,16,50], index: 0, kind: input, shape index: {}]
  %s1 = inlined_call_operand.vmem [shape: bf16[160,64], index: 1, kind: input, shape index: {}]
  %s2 = inlined_call_operand.vmem [shape: f32[8,64], index: 2, kind: input, shape index: {}]
  %s3 = inlined_call_operand.vmem [shape: f32[1,16,1], index: 3, kind: output, shape index: {}]
  %s4 = sld [smem:[#allocation0]]
  $region22: #{discriminator_z_forward.1} parent=0
    _
  %s6 = ssub.s32 1, %s4
  %s7 = scalar_select 0, %s6, %s4
  // Predicated region
  $region2: #{discriminator_z_forward.1} parent=0 // pred_check
    _
  $region3: #{discriminator_z_forward.1} parent=0 // pred_check_branch
    %9 = sbr.rel (0) target = $region5
  $region4: #{discriminator_z_forward.1} parent=0 // pred_region
    _
  $region5: #{discriminator_z_forward.1} parent=0 // pred_fallthru
    _
  // Predicated region
  $region6: #{discriminator_z_forward.1} parent=0 // pred_check
    _
  $region7: #{discriminator_z_forward.1} parent=0 // pred_check_branch
    %11 = sbr.rel (0) target = $region9
  $region8: #{discriminator_z_forward.1} parent=0 // pred_region
    _
  $region9: #{discriminator_z_forward.1} parent=0 // pred_fallthru
    _
  // Predicated region
  $region10: #{discriminator_z_forward.1} parent=0 // pred_check
    _
  $region11: #{discriminator_z_forward.1} parent=0 // pred_check_branch
    %13 = sbr.rel (0) target = $region13
  $region12: #{discriminator_z_forward.1} parent=0 // pred_region
    _
  $region13: #{discriminator_z_forward.1} parent=0 // pred_fallthru
    _
  %v15 = vld [vmem:[%s0] sm:$0xff]
  %v16 = vld [vmem:[%s0 + $0x8] sm:$0xff]
  %v17 = vld [vmem:[%s1] sm:$0xf]
  %v18 = vld [vmem:[%s1 + $0x4] sm:$0xf]
  %v19 = vld [vmem:[%s1 + $0x8] sm:$0xf]
  %v20 = vld [vmem:[%s1 + $0xc] sm:$0xf]
  %v21 = vld [vmem:[%s1 + $0x10] sm:$0xf]
  %v22 = vld [vmem:[%s1 + $0x14] sm:$0xf]
  %v23 = vld [vmem:[%s1 + $0x18] sm:$0x1]
  %v24 = vld [vmem:[%s1 + $0x20] sm:$0xf]
  %v25 = vld [vmem:[%s1 + $0x24] sm:$0xf]
  %v26 = vld [vmem:[%s1 + $0x28] sm:$0xf]
  %v27 = vld [vmem:[%s1 + $0x2c] sm:$0xf]
  %v28 = vld [vmem:[%s1 + $0x30] sm:$0xf]
  %v29 = vld [vmem:[%s1 + $0x34] sm:$0xf]
  %v30 = vld [vmem:[%s1 + $0x38] sm:$0xf]
  %v31 = vld [vmem:[%s1 + $0x3c] sm:$0xf]
  %v32 = vld [vmem:[%s1 + $0x40] sm:$0xf]
  %v33 = vld [vmem:[%s1 + $0x44] sm:$0xf]
  %v34 = vld [vmem:[%s1 + $0x48] sm:$0xf]
  %v35 = vld [vmem:[%s1 + $0x4c] sm:$0xf]
  %v36 = vld [vmem:[%s2] sm:$0x1]
  %v37 = vld [vmem:[%s2 + $0x1] sm:$0x1]
  %v38 = vld [vmem:[%s2 + $0x2] sm:$0x1]
  %v39 = vld [vmem:[%s2 + $0x3] sm:$0x1]
  %v40 = vld [vmem:[%s2 + $0x4] sm:$0x1]
  %v41 = vld [vmem:[%s2 + $0x5] sm:$0x1]
  %v42 = vld [vmem:[%s2 + $0x6] sm:$0x1]
  %v43 = vld [vmem:[%s2 + $0x7] sm:$0x1]
  %v44 = vpack.c.bf16 %v16, %v15
  %v52 = vunpack.c.l.b16 %v17
  %v53 = vunpack.c.l.b16 %v18
  %v54 = vunpack.c.l.b16 %v19
  %v55 = vunpack.c.l.b16 %v20
  %v56 = vunpack.c.l.b16 %v21
  %v57 = vunpack.c.l.b16 %v22
  %v58 = vunpack.c.l.b16 %v23
  %v59 = vpack.c.b16 %v53, %v52
  %v60 = vpack.c.b16 %v55, %v54
  %v61 = vpack.c.b16 %v57, %v56
  %v62 = vpack.c.b16 %v58, %v58
  %vm66 = vcmask 408576
  %v68 = vsel %vm66, %v44, 0
  %vm70 = vcmask 1040384
  %v72 = vsel %vm70, %v62, 0
  %74 = vmatprep.subr.bf16.mxu0 0
  %75 = vmatpush1.bf16.msra.mxu0 %v59
  %76 = vmatprep.subr.bf16.mxu0 0
  %77 = vmatpush1.bf16.msra.mxu0 %v60
  %78 = vmatprep.subr.bf16.mxu0 0
  %79 = vmatpush1.bf16.msra.mxu0 %v61
  %80 = vmatprep.subr.bf16.mxu0 0
  %81 = vmatpush1.bf16.msra.mxu0 %v72
  %82 = vmatprep.subr.bf16.mxu0 0
  %83 = vmatpush1.bf16.msra.mxu0 0
  %84 = vmatprep.subr.bf16.mxu0 0
  %85 = vmatpush1.bf16.msra.mxu0 0
  %86 = vmatprep.subr.bf16.mxu0 0
  %87 = vmatpush1.bf16.msra.mxu0 0
  %88 = vmatprep.subr.bf16.mxu0 0
  %89 = vmatpush1.bf16.msra.mxu0 0
  %90 = vmatprep.subr.bf16.mxu0 0
  %91 = vmatpush1.bf16.msra.mxu0 0
  %92 = vmatprep.subr.bf16.mxu0 0
  %93 = vmatpush1.bf16.msra.mxu0 0
  %94 = vmatprep.subr.bf16.mxu0 0
  %95 = vmatpush1.bf16.msra.mxu0 0
  %96 = vmatprep.subr.bf16.mxu0 0
  %97 = vmatpush1.bf16.msra.mxu0 0
  %98 = vmatprep.subr.bf16.mxu0 0
  %99 = vmatpush1.bf16.msra.mxu0 0
  %100 = vmatprep.subr.bf16.mxu0 0
  %101 = vmatpush1.bf16.msra.mxu0 0
  %102 = vmatprep.subr.bf16.mxu0 0
  %103 = vmatpush1.bf16.msra.mxu0 0
  %104 = vmatprep.subr.bf16.mxu0 0
  %105 = vmatpush1.bf16.msra.mxu0 0
  %106 = vmatprep.mubr.bf16.mxu0 0
  %107 = vmatmul.mubr.bf16.gmra.mrb[0].mxu0 %v68
  %v108 = vpop.f32.mrb[0].mxu0
  %v109 = vadd.f32 0.0, %v108
  %v110 = vpop.f32.mrb[0].mxu0
  %v111 = vpop.f32.mrb[0].mxu0
  %v112 = vadd.f32 0.0, %v111
  %v113 = vpop.f32.mrb[0].mxu0
  %114 = vdwg.mxu0
  %vm115 = vcmask 523264
  %v116 = vsel %vm115, %v109, 0.0
  %v117 = vsel %vm115, %v112, 0.0
  %v118 = vadd.f32 %v116, %v117
  %v119 = vrot.slane %v118, 4
  %v120 = vadd.f32 %v118, %v119
  %v121 = vrot.slane %v120, 2
  %v122 = vadd.f32 %v120, %v121
  %v123 = vrot.slane %v122, 1
  %v124 = vadd.f32 %v122, %v123
  %v125 = vrcp.pop 16.0
  %v126 = vmul.f32 %v124, %v125
  %v127 = vsub.f32 %v109, %v126
  %v128 = vsub.f32 %v112, %v126
  %v129 = vmul.f32 %v127, %v127
  %v130 = vmul.f32 %v128, %v128
  %v131 = vsel %vm115, %v129, 0.0
  %v132 = vsel %vm115, %v130, 0.0
  %v133 = vadd.f32 %v131, %v132
  %v134 = vrot.slane %v133, 4
  %v135 = vadd.f32 %v133, %v134
  %v136 = vrot.slane %v135, 2
  %v137 = vadd.f32 %v135, %v136
  %v138 = vrot.slane %v137, 1
  %v139 = vadd.f32 %v137, %v138
  %v140 = vmul.f32 %v139, %v125
  %v141 = vadd.f32 %v140, 1e-05
  %v142 = vrsqrt.pop %v141
  %v143 = vmul.f32 %v36, %v142
  %v144 = vmul.f32 %v126, %v143
  %v145 = vsub.f32 %v37, %v144
  %v146 = vlaneseq
  %v147 = vshrl.u32 %v146, 7
  %v148 = vsub.s32 0, %v147
  %v149 = vrot.slane %v143, %v148
  %v150 = vmul.f32 %v109, %v149
  %v151 = vmul.f32 %v112, %v149
  %v152 = vlaneseq
  %v153 = vshrl.u32 %v152, 7
  %v154 = vsub.s32 0, %v153
  %v155 = vrot.slane %v145, %v154
  %v156 = vadd.f32 %v150, %v155
  %v157 = vadd.f32 %v151, %v155
  %v158 = vmax.f32 %v156, 0.0
  %v159 = vmax.f32 %v157, 0.0
  %v160 = vpack.c.bf16 %v159, %v158
  %v169 = vunpack.c.l.b16 %v24
  %v170 = vunpack.c.l.b16 %v25
  %v171 = vunpack.c.l.b16 %v26
  %v172 = vunpack.c.l.b16 %v27
  %v173 = vunpack.c.l.b16 %v28
  %v174 = vunpack.c.l.b16 %v29
  %v175 = vunpack.c.l.b16 %v30
  %v176 = vunpack.c.l.b16 %v31
  %v177 = vpack.c.b16 %v170, %v169
  %v178 = vpack.c.b16 %v172, %v171
  %v179 = vpack.c.b16 %v174, %v173
  %v180 = vpack.c.b16 %v176, %v175
  %v186 = vsel %vm115, %v160, 0
  %188 = vmatprep.subr.bf16.mxu0 0
  %189 = vmatpush1.bf16.msra.mxu0 %v177
  %190 = vmatprep.subr.bf16.mxu0 0
  %191 = vmatpush1.bf16.msra.mxu0 %v178
  %192 = vmatprep.subr.bf16.mxu0 0
  %193 = vmatpush1.bf16.msra.mxu0 %v179
  %194 = vmatprep.subr.bf16.mxu0 0
  %195 = vmatpush1.bf16.msra.mxu0 %v180
  %196 = vmatprep.subr.bf16.mxu0 0
  %197 = vmatpush1.bf16.msra.mxu0 0
  %198 = vmatprep.subr.bf16.mxu0 0
  %199 = vmatpush1.bf16.msra.mxu0 0
  %200 = vmatprep.subr.bf16.mxu0 0
  %201 = vmatpush1.bf16.msra.mxu0 0
  %202 = vmatprep.subr.bf16.mxu0 0
  %203 = vmatpush1.bf16.msra.mxu0 0
  %204 = vmatprep.subr.bf16.mxu0 0
  %205 = vmatpush1.bf16.msra.mxu0 0
  %206 = vmatprep.subr.bf16.mxu0 0
  %207 = vmatpush1.bf16.msra.mxu0 0
  %208 = vmatprep.subr.bf16.mxu0 0
  %209 = vmatpush1.bf16.msra.mxu0 0
  %210 = vmatprep.subr.bf16.mxu0 0
  %211 = vmatpush1.bf16.msra.mxu0 0
  %212 = vmatprep.subr.bf16.mxu0 0
  %213 = vmatpush1.bf16.msra.mxu0 0
  %214 = vmatprep.subr.bf16.mxu0 0
  %215 = vmatpush1.bf16.msra.mxu0 0
  %216 = vmatprep.subr.bf16.mxu0 0
  %217 = vmatpush1.bf16.msra.mxu0 0
  %218 = vmatprep.subr.bf16.mxu0 0
  %219 = vmatpush1.bf16.msra.mxu0 0
  %220 = vmatprep.mubr.bf16.mxu0 0
  %221 = vmatmul.mubr.bf16.gmra.mrb[0].mxu0 %v186
  %v222 = vpop.f32.mrb[0].mxu0
  %v223 = vadd.f32 0.0, %v222
  %v224 = vpop.f32.mrb[0].mxu0
  %v225 = vpop.f32.mrb[0].mxu0
  %v226 = vadd.f32 0.0, %v225
  %v227 = vpop.f32.mrb[0].mxu0
  %228 = vdwg.mxu0
  %vm229 = vcmask 261120
  %v230 = vsel %vm229, %v223, 0.0
  %v231 = vsel %vm229, %v226, 0.0
  %v232 = vadd.f32 %v230, %v231
  %v233 = vrot.slane %v232, 4
  %v234 = vadd.f32 %v232, %v233
  %v235 = vrot.slane %v234, 2
  %v236 = vadd.f32 %v234, %v235
  %v237 = vrot.slane %v236, 1
  %v238 = vadd.f32 %v236, %v237
  %v239 = vmul.f32 %v238, %v125
  %v240 = vsub.f32 %v223, %v239
  %v241 = vsub.f32 %v226, %v239
  %v242 = vmul.f32 %v240, %v240
  %v243 = vmul.f32 %v241, %v241
  %v244 = vsel %vm229, %v242, 0.0
  %v245 = vsel %vm229, %v243, 0.0
  %v246 = vadd.f32 %v244, %v245
  %v247 = vrot.slane %v246, 4
  %v248 = vadd.f32 %v246, %v247
  %v249 = vrot.slane %v248, 2
  %v250 = vadd.f32 %v248, %v249
  %v251 = vrot.slane %v250, 1
  %v252 = vadd.f32 %v250, %v251
  %v253 = vmul.f32 %v252, %v125
  %v254 = vadd.f32 %v253, 1e-05
  %v255 = vrsqrt.pop %v254
  %v256 = vmul.f32 %v38, %v255
  %v257 = vmul.f32 %v239, %v256
  %v258 = vsub.f32 %v39, %v257
  %v259 = vlaneseq
  %v260 = vshrl.u32 %v259, 7
  %v261 = vsub.s32 0, %v260
  %v262 = vrot.slane %v256, %v261
  %v263 = vmul.f32 %v223, %v262
  %v264 = vmul.f32 %v226, %v262
  %v265 = vlaneseq
  %v266 = vshrl.u32 %v265, 7
  %v267 = vsub.s32 0, %v266
  %v268 = vrot.slane %v258, %v267
  %v269 = vadd.f32 %v263, %v268
  %v270 = vadd.f32 %v264, %v268
  %v271 = vmax.f32 %v269, 0.0
  %v272 = vmax.f32 %v270, 0.0
  %v273 = vpack.c.bf16 %v272, %v271
  %v278 = vunpack.c.l.b16 %v32
  %v279 = vunpack.c.l.b16 %v33
  %v280 = vunpack.c.l.b16 %v34
  %v281 = vunpack.c.l.b16 %v35
  %v282 = vpack.c.b16 %v279, %v278
  %v283 = vpack.c.b16 %v281, %v280
  %v287 = vsel %vm229, %v273, 0
  %289 = vmatprep.subr.bf16.mxu0 0
  %290 = vmatpush1.bf16.msra.mxu0 %v282
  %291 = vmatprep.subr.bf16.mxu0 0
  %292 = vmatpush1.bf16.msra.mxu0 %v283
  %293 = vmatprep.subr.bf16.mxu0 0
  %294 = vmatpush1.bf16.msra.mxu0 0
  %295 = vmatprep.subr.bf16.mxu0 0
  %296 = vmatpush1.bf16.msra.mxu0 0
  %297 = vmatprep.subr.bf16.mxu0 0
  %298 = vmatpush1.bf16.msra.mxu0 0
  %299 = vmatprep.subr.bf16.mxu0 0
  %300 = vmatpush1.bf16.msra.mxu0 0
  %301 = vmatprep.subr.bf16.mxu0 0
  %302 = vmatpush1.bf16.msra.mxu0 0
  %303 = vmatprep.subr.bf16.mxu0 0
  %304 = vmatpush1.bf16.msra.mxu0 0
  %305 = vmatprep.subr.bf16.mxu0 0
  %306 = vmatpush1.bf16.msra.mxu0 0
  %307 = vmatprep.subr.bf16.mxu0 0
  %308 = vmatpush1.bf16.msra.mxu0 0
  %309 = vmatprep.subr.bf16.mxu0 0
  %310 = vmatpush1.bf16.msra.mxu0 0
  %311 = vmatprep.subr.bf16.mxu0 0
  %312 = vmatpush1.bf16.msra.mxu0 0
  %313 = vmatprep.subr.bf16.mxu0 0
  %314 = vmatpush1.bf16.msra.mxu0 0
  %315 = vmatprep.subr.bf16.mxu0 0
  %316 = vmatpush1.bf16.msra.mxu0 0
  %317 = vmatprep.subr.bf16.mxu0 0
  %318 = vmatpush1.bf16.msra.mxu0 0
  %319 = vmatprep.subr.bf16.mxu0 0
  %320 = vmatpush1.bf16.msra.mxu0 0
  %321 = vmatprep.mubr.bf16.mxu0 0
  %322 = vmatmul.mubr.bf16.gmra.mrb[0].mxu0 %v287
  %v323 = vpop.f32.mrb[0].mxu0
  %v324 = vadd.f32 0.0, %v323
  %v325 = vpop.f32.mrb[0].mxu0
  %v326 = vpop.f32.mrb[0].mxu0
  %v327 = vadd.f32 0.0, %v326
  %v328 = vpop.f32.mrb[0].mxu0
  %329 = vdwg.mxu0
  %vm330 = vcmask 130048
  %v331 = vsel %vm330, %v324, 0.0
  %v332 = vsel %vm330, %v327, 0.0
  %v333 = vadd.f32 %v331, %v332
  %v334 = vrot.slane %v333, 4
  %v335 = vadd.f32 %v333, %v334
  %v336 = vrot.slane %v335, 2
  %v337 = vadd.f32 %v335, %v336
  %v338 = vrot.slane %v337, 1
  %v339 = vadd.f32 %v337, %v338
  %v340 = vmul.f32 %v339, %v125
  %v341 = vsub.f32 %v324, %v340
  %v342 = vsub.f32 %v327, %v340
  %v343 = vmul.f32 %v341, %v341
  %v344 = vmul.f32 %v342, %v342
  %v345 = vsel %vm330, %v343, 0.0
  %v346 = vsel %vm330, %v344, 0.0
  %v347 = vadd.f32 %v345, %v346
  %v348 = vrot.slane %v347, 4
  %v349 = vadd.f32 %v347, %v348
  %v350 = vrot.slane %v349, 2
  %v351 = vadd.f32 %v349, %v350
  %v352 = vrot.slane %v351, 1
  %v353 = vadd.f32 %v351, %v352
  %v354 = vmul.f32 %v353, %v125
  %v355 = vadd.f32 %v354, 1e-05
  %v356 = vrsqrt.pop %v355
  %v357 = vmul.f32 %v40, %v356
  %v358 = vmul.f32 %v340, %v357
  %v359 = vsub.f32 %v41, %v358
  %v360 = vlaneseq
  %v361 = vshrl.u32 %v360, 7
  %v362 = vsub.s32 0, %v361
  %v363 = vrot.slane %v357, %v362
  %v364 = vmul.f32 %v324, %v363
  %v365 = vmul.f32 %v327, %v363
  %v366 = vlaneseq
  %v367 = vshrl.u32 %v366, 7
  %v368 = vsub.s32 0, %v367
  %v369 = vrot.slane %v359, %v368
  %v370 = vadd.f32 %v364, %v369
  %v371 = vadd.f32 %v365, %v369
  %v372 = vmax.f32 %v370, 0.0
  %v373 = vmax.f32 %v371, 0.0
  %v374 = vlaneseq
  %v375 = vshrl.u32 %v374, 7
  %v376 = vsub.s32 0, %v375
  %v377 = vrot.slane %v42, %v376
  %v378 = vmul.f32 %v372, %v377
  %v379 = vmul.f32 %v373, %v377
  %v380 = vsel %vm330, %v378, 0.0
  %381 = vadd.xlane.f32.xlu0 %v380
  %v382 = vpop.xlane.xlu0 %381
  %v383 = vsel %vm330, %v379, 0.0
  %384 = vadd.xlane.f32.xlu0 %v383
  %v385 = vpop.xlane.xlu0 %384
  %v386 = vlaneseq
  %v387 = vshrl.u32 %v386, 7
  %v388 = vsub.s32 0, %v387
  %v389 = vrot.slane %v43, %v388
  %v390 = vadd.f32 %v382, %v389
  %v391 = vadd.f32 %v385, %v389
  %vm392 = vcmask 7168
  %393 = vst.msk [vmem:[%s3] sm:$0xff] %vm392, %v390
  %394 = vst.msk [vmem:[%s3 + $0x8] sm:$0xff] %vm392, %v391
  // Predicated region
  $region14: #{discriminator_z_forward.1} parent=0 // pred_check
    _
  $region15: #{discriminator_z_forward.1} parent=0 // pred_check_branch
    %396 = sbr.rel (0) target = $region17
  $region16: #{discriminator_z_forward.1} parent=0 // pred_region
    _
  $region17: #{discriminator_z_forward.1} parent=0 // pred_fallthru
    _
  // Predicated region
  $region18: #{discriminator_z_forward.1} parent=0 // pred_check
    _
  $region19: #{discriminator_z_forward.1} parent=0 // pred_check_branch
    %398 = sbr.rel (0) target = $region21
  $region20: #{discriminator_z_forward.1} parent=0 // pred_region
    _
  $region21: #{discriminator_z_forward.1} parent=0 // pred_fallthru
    _

</llo_original>
